<compile_context>
chip_gen: v7x
topology: tpu7x:2x2x1
jax: 0.10.0
libtpu: 0.0.40
codegen_flags: <defaults>
</compile_context>

<pallas_src>
import functools

import jax
import jax.numpy as jnp
from jax import lax
from jax.experimental import pallas as pl
from jax.experimental.pallas import tpu as pltpu

_EPS = 1e-6  # matches torch F.pairwise_distance default eps (added to the difference)


def _contrastive_loss_kernel(a_ref, p_ref, n_ref, o_ref, *,
                             margin, feat, fold, batch_folded,
                             block_rows, tiles_per_core, need_mask):
    c = pl.program_id(0)   # parallel (megacore) slot
    i = pl.program_id(1)   # sequential tile index within the slot

    @pl.when(i == 0)
    def _init():
        o_ref[...] = jnp.zeros_like(o_ref)

    # Upcast before arithmetic (supports bf16 embeddings; required on v5e).
    a = a_ref[...].astype(jnp.float32)
    p = p_ref[...].astype(jnp.float32)
    n = n_ref[...].astype(jnp.float32)

    dpos = a - p + _EPS
    dneg = a - n + _EPS
    sp = dpos * dpos
    sn = dneg * dneg

    if fold == 1:
        pos_sq = jnp.sum(sp, axis=-1, keepdims=True)             # (TB, 1)
        neg_sq = jnp.sum(sn, axis=-1, keepdims=True)
        hinge = jnp.maximum(jnp.sqrt(pos_sq) - jnp.sqrt(neg_sq) + margin, 0.0)
    else:
        # Each kernel row packs `fold` logical rows of width `feat` along the lanes.
        # Exact segmented per-logical-row reduction via lane masks (VPU/XLU only;
        # both have slack under the DMA roofline).
        dk = fold * feat
        lane = lax.broadcasted_iota(jnp.int32, (1, dk), 1)
        hinge = None
        for k in range(fold):
            seg = (lane >= k * feat) & (lane < (k + 1) * feat)
            pos_sq = jnp.sum(jnp.where(seg, sp, 0.0), axis=-1, keepdims=True)
            neg_sq = jnp.sum(jnp.where(seg, sn, 0.0), axis=-1, keepdims=True)
            h_k = jnp.maximum(jnp.sqrt(pos_sq) - jnp.sqrt(neg_sq) + margin, 0.0)
            hinge = h_k if hinge is None else hinge + h_k         # (TB, 1)

    if need_mask:
        # Rows past the true (folded) batch size: partial last tile and clamped
        # duplicate tiles.  True select -- garbage/NaN in padded rows cannot propagate.
        row = ((c * tiles_per_core + i) * block_rows
               + lax.broadcasted_iota(jnp.int32, hinge.shape, 0))
        hinge = jnp.where(row < batch_folded, hinge, 0.0)

    # Per-core partial sum, accumulated directly in the resident output block.
    o_ref[...] += jnp.sum(hinge, axis=0, keepdims=True)[None]     # (1, 1, 1)


def _round_up(x, m):
    return ((x + m - 1) // m) * m


def _vmem_capacity_bytes():
    """Per-TensorCore VMEM capacity; generation-aware fallback if the query fails."""
    try:
        info = pltpu.get_tpu_info()
        cap = getattr(info, "vmem_capacity_bytes", None)
        if cap:
            return int(cap)
    except Exception:
        pass
    try:
        kind = jax.devices()[0].device_kind.lower()
    except Exception:
        kind = ""
    if "v7" in kind:
        return 64 << 20           # v7x: 64 MiB per TensorCore
    return 128 << 20              # v5e / v6e: 128 MiB


def _num_parallel_slots():
    """TensorCores per chip for the 'parallel' grid axis (megacore sharding).

    Defaults to 2 (covers v7x); on single-TC chips (v5e/v6e) the extra slot simply
    runs serially at negligible cost, so over-provisioning is safe."""
    try:
        info = pltpu.get_tpu_info()
        for attr in ("num_cores", "core_count", "tensorcore_count"):
            v = getattr(info, attr, None)
            if v:
                return max(1, min(int(v), 2))
    except Exception:
        pass
    return 2


def _auto_block_rows(feat_k, itemsize, vmem_cap):
    """Rows per tile, sized by bytes (lane padding + f32 working set included)."""
    lanes = _round_up(max(int(feat_k), 1), 128)
    per_row_in = lanes * itemsize            # one input row in VMEM (lane-padded)
    per_row_f32 = lanes * 4                  # one f32 working-set row
    # 3 inputs x 2 pipeline buffers + ~6 f32 temporaries, against half of VMEM.
    per_row_total = 3 * 2 * per_row_in + 6 * per_row_f32
    tb_vmem = (vmem_cap // 2) // per_row_total
    # ~8 MiB per input buffer keeps the ~0.35us/step grid overhead negligible.
    tb_target = (8 << 20) // per_row_in
    return max(8, min(tb_vmem, tb_target))


def contrastive_loss(anchor, positive, negative, margin=1.0, *, block_rows=None):
    """Pallas TPU implementation of ContrastiveLoss.forward.

    anchor, positive, negative: (B, D) arrays (f32 or bf16; bf16 halves HBM traffic
    and is recommended where accuracy allows -- the kernel upcasts to f32 internally).
    Returns a scalar float32 loss.
    """
    assert anchor.shape == positive.shape == negative.shape
    assert anchor.ndim == 2
    B, D = anchor.shape
    itemsize = jnp.dtype(anchor.dtype).itemsize

    # Lane folding: pack g = 128 // D logical rows per kernel row so the (8,128)
    # HBM tiling carries no lane padding (up to 4x fewer DMA bytes at D=32).
    fold = 1
    if 0 < D < 128 and 128 % D == 0:
        g = 128 // D
        if B % g == 0 and B // g > 0:
            fold = g
    Bf = B // fold
    Dk = D * fold
    if fold > 1:
        anchor = anchor.reshape(Bf, Dk)
        positive = positive.reshape(Bf, Dk)
        negative = negative.reshape(Bf, Dk)

    vmem_cap = _vmem_capacity_bytes()
    tb = _auto_block_rows(Dk, itemsize, vmem_cap) if block_rows is None else int(block_rows)
    sub = max(8, 32 // max(itemsize, 1))     # sublane multiple: 8 f32 / 16 bf16 / 32 i8
    if tb >= Bf:
        tb = Bf                              # single block: block dims == array dims
    else:
        tb = max(sub, (tb // sub) * sub)

    num_blocks = (Bf + tb - 1) // tb
    num_cores = max(1, min(_num_parallel_slots(), num_blocks))
    tiles_per_core = (num_blocks + num_cores - 1) // num_cores
    need_mask = (num_cores * tiles_per_core * tb) != Bf

    def in_index(c, i):
        # Clamp duplicate tiles (when the grid over-covers) onto the last real block;
        # their rows are fully masked out in-kernel.
        t = jnp.minimum(c * tiles_per_core + i, num_blocks - 1)
        return (t, 0)

    # Raise the scoped VMEM limit to cover the chosen tiles (defaults are 16/32 MiB),
    # counting lane padding and the f32 working set.
    lanes = _round_up(Dk, 128)
    need = 3 * 2 * tb * lanes * itemsize + 6 * tb * lanes * 4 + (2 << 20)
    vmem_limit = int(min(max(need, 32 << 20), int(vmem_cap * 0.9)))

    kernel = functools.partial(
        _contrastive_loss_kernel,
        margin=float(margin), feat=D, fold=fold, batch_folded=Bf,
        block_rows=tb, tiles_per_core=tiles_per_core, need_mask=need_mask,
    )

    partials = pl.pallas_call(
        kernel,
        out_shape=jax.ShapeDtypeStruct((num_cores, 1, 1), jnp.float32),
        grid_spec=pltpu.PrefetchScalarGridSpec(
            num_scalar_prefetch=0,
            grid=(num_cores, tiles_per_core),
            in_specs=[
                pl.BlockSpec((tb, Dk), in_index),
                pl.BlockSpec((tb, Dk), in_index),
                pl.BlockSpec((tb, Dk), in_index),
            ],
            out_specs=pl.BlockSpec((1, 1, 1), lambda c, i: (c, 0, 0)),
        ),
        compiler_params=pltpu.CompilerParams(
            dimension_semantics=("parallel", "arbitrary"),
            vmem_limit_bytes=vmem_limit,
        ),
    )(anchor, positive, negative)

    return jnp.sum(partials) * (1.0 / B)


def _reference(anchor, positive, negative, margin=1.0):
    a = anchor.astype(jnp.float32)
    p = positive.astype(jnp.float32)
    n = negative.astype(jnp.float32)
    pos = jnp.sqrt(jnp.sum((a - p + _EPS) ** 2, axis=-1))
    neg = jnp.sqrt(jnp.sum((a - n + _EPS) ** 2, axis=-1))
    return jnp.mean(jnp.maximum(pos - neg + margin, 0.0))


if __name__ == "__main__":
    key = jax.random.PRNGKey(0)
    k1, k2, k3 = jax.random.split(key, 3)

    # Small shape matching the module spec; exercises the lane-folded path (D=32 -> fold=4).
    B, D = 8, 32
    anchor = jax.random.normal(k1, (B, D), dtype=jnp.float32)
    positive = jax.random.normal(k2, (B, D), dtype=jnp.float32)
    negative = jax.random.normal(k3, (B, D), dtype=jnp.float32)
    loss = jax.block_until_ready(contrastive_loss(anchor, positive, negative, margin=1.0))
    ref = _reference(anchor, positive, negative, margin=1.0)
    assert jnp.allclose(loss, ref, rtol=1e-5, atol=1e-5), (loss, ref)

    # Tiled path: multiple grid steps, megacore split, partial-tile masking, D=128 (no fold).
    B2, D2 = 20, 128
    k4, k5, k6 = jax.random.split(jax.random.PRNGKey(1), 3)
    a2 = jax.random.normal(k4, (B2, D2), dtype=jnp.float32)
    p2 = jax.random.normal(k5, (B2, D2), dtype=jnp.float32)
    n2 = jax.random.normal(k6, (B2, D2), dtype=jnp.float32)
    loss2 = jax.block_until_ready(contrastive_loss(a2, p2, n2, margin=1.0, block_rows=8))
    ref2 = _reference(a2, p2, n2, margin=1.0)
    assert jnp.allclose(loss2, ref2, rtol=1e-5, atol=1e-5), (loss2, ref2)

    # bf16 inputs (halved HBM traffic) exercising the fold=2 path and the f32 upcast.
    B3, D3 = 32, 64
    k7, k8, k9 = jax.random.split(jax.random.PRNGKey(2), 3)
    a3 = jax.random.normal(k7, (B3, D3), dtype=jnp.bfloat16)
    p3 = jax.random.normal(k8, (B3, D3), dtype=jnp.bfloat16)
    n3 = jax.random.normal(k9, (B3, D3), dtype=jnp.bfloat16)
    loss3 = jax.block_until_ready(contrastive_loss(a3, p3, n3, margin=1.0))
    ref3 = _reference(a3, p3, n3, margin=1.0)
    assert jnp.allclose(loss3, ref3, rtol=1e-4, atol=1e-4), (loss3, ref3)

    print("KERNEL_OK")
</pallas_src>

<mosaic_0001>
module attributes {stable_mosaic.version = 11 : i64} {
  func.func @_contrastive_loss_kernel(%arg0: i32, %arg1: i32, %arg2: memref<2x128xf32, #tpu.memory_space<vmem>>, %arg3: memref<2x128xf32, #tpu.memory_space<vmem>>, %arg4: memref<2x128xf32, #tpu.memory_space<vmem>>, %arg5: memref<1x1x1xf32, #tpu.memory_space<vmem>>) attributes {dimension_semantics = [#tpu.dimension_semantics<parallel>, #tpu.dimension_semantics<arbitrary>], iteration_bounds = array<i64: 1, 1>, scalar_prefetch = 0 : i64, scratch_operands = 0 : i64, tpu.core_type = #tpu.core_type<tc>, window_params = [{transform_indices = @transform_0, window_bounds = array<i64: 2, 128>}, {transform_indices = @transform_1, window_bounds = array<i64: 2, 128>}, {transform_indices = @transform_2, window_bounds = array<i64: 2, 128>}, {transform_indices = @transform_3, window_bounds = array<i64: 1, 1, 1>}]} {
    %c0_i32 = arith.constant 0 : i32
    %0 = arith.cmpi eq, %arg1, %c0_i32 : i32
    %1 = arith.extui %0 : i1 to i32
    %c0_i32_0 = arith.constant 0 : i32
    %2 = arith.cmpi ne, %1, %c0_i32_0 : i32
    scf.if %2 {
      %cst_42 = arith.constant 0.000000e+00 : f32
      %120 = vector.broadcast %cst_42 : f32 to vector<1x1x1xf32>
      %c0_43 = arith.constant 0 : index
      %c0_44 = arith.constant 0 : index
      %c0_45 = arith.constant 0 : index
      %121 = vector.load %arg5[%c0_43, %c0_44, %c0_45] : memref<1x1x1xf32, #tpu.memory_space<vmem>>, vector<1x1x1xf32>
      tpu.vector_store %arg5[%c0_43, %c0_44, %c0_45], %120 {strides = array<i32>} : memref<1x1x1xf32, #tpu.memory_space<vmem>>, vector<1x1x1xf32>,
    } else {
    }
    %c0 = arith.constant 0 : index
    %c0_1 = arith.constant 0 : index
    %3 = vector.load %arg2[%c0, %c0_1] : memref<2x128xf32, #tpu.memory_space<vmem>>, vector<2x128xf32>
    %c0_2 = arith.constant 0 : index
    %c0_3 = arith.constant 0 : index
    %4 = vector.load %arg3[%c0_2, %c0_3] : memref<2x128xf32, #tpu.memory_space<vmem>>, vector<2x128xf32>
    %c0_4 = arith.constant 0 : index
    %c0_5 = arith.constant 0 : index
    %5 = vector.load %arg4[%c0_4, %c0_5] : memref<2x128xf32, #tpu.memory_space<vmem>>, vector<2x128xf32>
    %6 = arith.subf %3, %4 : vector<2x128xf32>
    %cst = arith.constant 9.99999997E-7 : f32
    %7 = vector.broadcast %cst : f32 to vector<2x128xf32>
    %8 = arith.addf %6, %7 : vector<2x128xf32>
    %9 = arith.subf %3, %5 : vector<2x128xf32>
    %cst_6 = arith.constant 9.99999997E-7 : f32
    %10 = vector.broadcast %cst_6 : f32 to vector<2x128xf32>
    %11 = arith.addf %9, %10 : vector<2x128xf32>
    %12 = arith.mulf %8, %8 : vector<2x128xf32>
    %13 = arith.mulf %11, %11 : vector<2x128xf32>
    %14 = tpu.iota {dimensions = array<i32: 1>} : vector<1x128xi32>
    %c0_i32_7 = arith.constant 0 : i32
    %15 = vector.broadcast %c0_i32_7 : i32 to vector<1x128xi32>
    %16 = arith.cmpi sge, %14, %15 : vector<1x128xi32>
    %c32_i32 = arith.constant 32 : i32
    %17 = vector.broadcast %c32_i32 : i32 to vector<1x128xi32>
    %18 = arith.cmpi slt, %14, %17 : vector<1x128xi32>
    %19 = arith.andi %16, %18 : vector<1x128xi1>
    %cst_8 = arith.constant 0.000000e+00 : f32
    %20 = vector.shape_cast %19 : vector<1x128xi1> to vector<1x128xi1>
    %21 = vector.broadcast %20 : vector<1x128xi1> to vector<2x128xi1>
    %22 = vector.broadcast %cst_8 : f32 to vector<2x128xf32>
    %23 = arith.select %21, %12, %22 : vector<2x128xi1>, vector<2x128xf32>
    %cst_9 = arith.constant dense<0.000000e+00> : vector<2xf32>
    %24 = vector.multi_reduction <add>, %23, %cst_9 [1] : vector<2x128xf32> to vector<2xf32>
    %25 = vector.shape_cast %24 : vector<2xf32> to vector<2x1xf32>
    %cst_10 = arith.constant 0.000000e+00 : f32
    %26 = vector.shape_cast %19 : vector<1x128xi1> to vector<1x128xi1>
    %27 = vector.broadcast %26 : vector<1x128xi1> to vector<2x128xi1>
    %28 = vector.broadcast %cst_10 : f32 to vector<2x128xf32>
    %29 = arith.select %27, %13, %28 : vector<2x128xi1>, vector<2x128xf32>
    %cst_11 = arith.constant dense<0.000000e+00> : vector<2xf32>
    %30 = vector.multi_reduction <add>, %29, %cst_11 [1] : vector<2x128xf32> to vector<2xf32>
    %31 = vector.shape_cast %30 : vector<2xf32> to vector<2x1xf32>
    %32 = math.sqrt %25 : vector<2x1xf32>
    %33 = math.sqrt %31 : vector<2x1xf32>
    %34 = arith.subf %32, %33 : vector<2x1xf32>
    %cst_12 = arith.constant 1.000000e+00 : f32
    %35 = vector.broadcast %cst_12 : f32 to vector<2x1xf32>
    %36 = arith.addf %34, %35 : vector<2x1xf32>
    %cst_13 = arith.constant 0.000000e+00 : f32
    %37 = vector.broadcast %cst_13 : f32 to vector<2x1xf32>
    %38 = arith.maximumf %36, %37 : vector<2x1xf32>
    %c32_i32_14 = arith.constant 32 : i32
    %39 = vector.broadcast %c32_i32_14 : i32 to vector<1x128xi32>
    %40 = arith.cmpi sge, %14, %39 : vector<1x128xi32>
    %c64_i32 = arith.constant 64 : i32
    %41 = vector.broadcast %c64_i32 : i32 to vector<1x128xi32>
    %42 = arith.cmpi slt, %14, %41 : vector<1x128xi32>
    %43 = arith.andi %40, %42 : vector<1x128xi1>
    %cst_15 = arith.constant 0.000000e+00 : f32
    %44 = vector.shape_cast %43 : vector<1x128xi1> to vector<1x128xi1>
    %45 = vector.broadcast %44 : vector<1x128xi1> to vector<2x128xi1>
    %46 = vector.broadcast %cst_15 : f32 to vector<2x128xf32>
    %47 = arith.select %45, %12, %46 : vector<2x128xi1>, vector<2x128xf32>
    %cst_16 = arith.constant dense<0.000000e+00> : vector<2xf32>
    %48 = vector.multi_reduction <add>, %47, %cst_16 [1] : vector<2x128xf32> to vector<2xf32>
    %49 = vector.shape_cast %48 : vector<2xf32> to vector<2x1xf32>
    %cst_17 = arith.constant 0.000000e+00 : f32
    %50 = vector.shape_cast %43 : vector<1x128xi1> to vector<1x128xi1>
    %51 = vector.broadcast %50 : vector<1x128xi1> to vector<2x128xi1>
    %52 = vector.broadcast %cst_17 : f32 to vector<2x128xf32>
    %53 = arith.select %51, %13, %52 : vector<2x128xi1>, vector<2x128xf32>
    %cst_18 = arith.constant dense<0.000000e+00> : vector<2xf32>
    %54 = vector.multi_reduction <add>, %53, %cst_18 [1] : vector<2x128xf32> to vector<2xf32>
    %55 = vector.shape_cast %54 : vector<2xf32> to vector<2x1xf32>
    %56 = math.sqrt %49 : vector<2x1xf32>
    %57 = math.sqrt %55 : vector<2x1xf32>
    %58 = arith.subf %56, %57 : vector<2x1xf32>
    %cst_19 = arith.constant 1.000000e+00 : f32
    %59 = vector.broadcast %cst_19 : f32 to vector<2x1xf32>
    %60 = arith.addf %58, %59 : vector<2x1xf32>
    %cst_20 = arith.constant 0.000000e+00 : f32
    %61 = vector.broadcast %cst_20 : f32 to vector<2x1xf32>
    %62 = arith.maximumf %60, %61 : vector<2x1xf32>
    %63 = arith.addf %38, %62 : vector<2x1xf32>
    %c64_i32_21 = arith.constant 64 : i32
    %64 = vector.broadcast %c64_i32_21 : i32 to vector<1x128xi32>
    %65 = arith.cmpi sge, %14, %64 : vector<1x128xi32>
    %c96_i32 = arith.constant 96 : i32
    %66 = vector.broadcast %c96_i32 : i32 to vector<1x128xi32>
    %67 = arith.cmpi slt, %14, %66 : vector<1x128xi32>
    %68 = arith.andi %65, %67 : vector<1x128xi1>
    %cst_22 = arith.constant 0.000000e+00 : f32
    %69 = vector.shape_cast %68 : vector<1x128xi1> to vector<1x128xi1>
    %70 = vector.broadcast %69 : vector<1x128xi1> to vector<2x128xi1>
    %71 = vector.broadcast %cst_22 : f32 to vector<2x128xf32>
    %72 = arith.select %70, %12, %71 : vector<2x128xi1>, vector<2x128xf32>
    %cst_23 = arith.constant dense<0.000000e+00> : vector<2xf32>
    %73 = vector.multi_reduction <add>, %72, %cst_23 [1] : vector<2x128xf32> to vector<2xf32>
    %74 = vector.shape_cast %73 : vector<2xf32> to vector<2x1xf32>
    %cst_24 = arith.constant 0.000000e+00 : f32
    %75 = vector.shape_cast %68 : vector<1x128xi1> to vector<1x128xi1>
    %76 = vector.broadcast %75 : vector<1x128xi1> to vector<2x128xi1>
    %77 = vector.broadcast %cst_24 : f32 to vector<2x128xf32>
    %78 = arith.select %76, %13, %77 : vector<2x128xi1>, vector<2x128xf32>
    %cst_25 = arith.constant dense<0.000000e+00> : vector<2xf32>
    %79 = vector.multi_reduction <add>, %78, %cst_25 [1] : vector<2x128xf32> to vector<2xf32>
    %80 = vector.shape_cast %79 : vector<2xf32> to vector<2x1xf32>
    %81 = math.sqrt %74 : vector<2x1xf32>
    %82 = math.sqrt %80 : vector<2x1xf32>
    %83 = arith.subf %81, %82 : vector<2x1xf32>
    %cst_26 = arith.constant 1.000000e+00 : f32
    %84 = vector.broadcast %cst_26 : f32 to vector<2x1xf32>
    %85 = arith.addf %83, %84 : vector<2x1xf32>
    %cst_27 = arith.constant 0.000000e+00 : f32
    %86 = vector.broadcast %cst_27 : f32 to vector<2x1xf32>
    %87 = arith.maximumf %85, %86 : vector<2x1xf32>
    %88 = arith.addf %63, %87 : vector<2x1xf32>
    %c96_i32_28 = arith.constant 96 : i32
    %89 = vector.broadcast %c96_i32_28 : i32 to vector<1x128xi32>
    %90 = arith.cmpi sge, %14, %89 : vector<1x128xi32>
    %c128_i32 = arith.constant 128 : i32
    %91 = vector.broadcast %c128_i32 : i32 to vector<1x128xi32>
    %92 = arith.cmpi slt, %14, %91 : vector<1x128xi32>
    %93 = arith.andi %90, %92 : vector<1x128xi1>
    %cst_29 = arith.constant 0.000000e+00 : f32
    %94 = vector.shape_cast %93 : vector<1x128xi1> to vector<1x128xi1>
    %95 = vector.broadcast %94 : vector<1x128xi1> to vector<2x128xi1>
    %96 = vector.broadcast %cst_29 : f32 to vector<2x128xf32>
    %97 = arith.select %95, %12, %96 : vector<2x128xi1>, vector<2x128xf32>
    %cst_30 = arith.constant dense<0.000000e+00> : vector<2xf32>
    %98 = vector.multi_reduction <add>, %97, %cst_30 [1] : vector<2x128xf32> to vector<2xf32>
    %99 = vector.shape_cast %98 : vector<2xf32> to vector<2x1xf32>
    %cst_31 = arith.constant 0.000000e+00 : f32
    %100 = vector.shape_cast %93 : vector<1x128xi1> to vector<1x128xi1>
    %101 = vector.broadcast %100 : vector<1x128xi1> to vector<2x128xi1>
    %102 = vector.broadcast %cst_31 : f32 to vector<2x128xf32>
    %103 = arith.select %101, %13, %102 : vector<2x128xi1>, vector<2x128xf32>
    %cst_32 = arith.constant dense<0.000000e+00> : vector<2xf32>
    %104 = vector.multi_reduction <add>, %103, %cst_32 [1] : vector<2x128xf32> to vector<2xf32>
    %105 = vector.shape_cast %104 : vector<2xf32> to vector<2x1xf32>
    %106 = math.sqrt %99 : vector<2x1xf32>
    %107 = math.sqrt %105 : vector<2x1xf32>
    %108 = arith.subf %106, %107 : vector<2x1xf32>
    %cst_33 = arith.constant 1.000000e+00 : f32
    %109 = vector.broadcast %cst_33 : f32 to vector<2x1xf32>
    %110 = arith.addf %108, %109 : vector<2x1xf32>
    %cst_34 = arith.constant 0.000000e+00 : f32
    %111 = vector.broadcast %cst_34 : f32 to vector<2x1xf32>
    %112 = arith.maximumf %110, %111 : vector<2x1xf32>
    %113 = arith.addf %88, %112 : vector<2x1xf32>
    %c0_35 = arith.constant 0 : index
    %c0_36 = arith.constant 0 : index
    %c0_37 = arith.constant 0 : index
    %114 = vector.load %arg5[%c0_35, %c0_36, %c0_37] : memref<1x1x1xf32, #tpu.memory_space<vmem>>, vector<1x1x1xf32>
    %cst_38 = arith.constant dense<0.000000e+00> : vector<1xf32>
    %115 = vector.multi_reduction <add>, %113, %cst_38 [0] : vector<2x1xf32> to vector<1xf32>
    %116 = vector.shape_cast %115 : vector<1xf32> to vector<1x1xf32>
    %117 = vector.shape_cast %116 : vector<1x1xf32> to vector<1x1x1xf32>
    %118 = arith.addf %114, %117 : vector<1x1x1xf32>
    %c0_39 = arith.constant 0 : index
    %c0_40 = arith.constant 0 : index
    %c0_41 = arith.constant 0 : index
    %119 = vector.load %arg5[%c0_39, %c0_40, %c0_41] : memref<1x1x1xf32, #tpu.memory_space<vmem>>, vector<1x1x1xf32>
    tpu.vector_store %arg5[%c0_39, %c0_40, %c0_41], %118 {strides = array<i32>} : memref<1x1x1xf32, #tpu.memory_space<vmem>>, vector<1x1x1xf32>,
    return
  }
  func.func @transform_0(%arg0: i32, %arg1: i32) -> (i32, i32) {
    %c1_i32 = arith.constant 1 : i32
    %0 = arith.muli %arg0, %c1_i32 : i32
    %1 = arith.addi %0, %arg1 : i32
    %c0_i32 = arith.constant 0 : i32
    %2 = arith.minsi %1, %c0_i32 : i32
    %c0_i32_0 = arith.constant 0 : i32
    %c0_i32_1 = arith.constant 0 : i32
    return %2, %c0_i32_0 : i32, i32
  }
  func.func @transform_1(%arg0: i32, %arg1: i32) -> (i32, i32) {
    %c1_i32 = arith.constant 1 : i32
    %0 = arith.muli %arg0, %c1_i32 : i32
    %1 = arith.addi %0, %arg1 : i32
    %c0_i32 = arith.constant 0 : i32
    %2 = arith.minsi %1, %c0_i32 : i32
    %c0_i32_0 = arith.constant 0 : i32
    %c0_i32_1 = arith.constant 0 : i32
    return %2, %c0_i32_0 : i32, i32
  }
  func.func @transform_2(%arg0: i32, %arg1: i32) -> (i32, i32) {
    %c1_i32 = arith.constant 1 : i32
    %0 = arith.muli %arg0, %c1_i32 : i32
    %1 = arith.addi %0, %arg1 : i32
    %c0_i32 = arith.constant 0 : i32
    %2 = arith.minsi %1, %c0_i32 : i32
    %c0_i32_0 = arith.constant 0 : i32
    %c0_i32_1 = arith.constant 0 : i32
    return %2, %c0_i32_0 : i32, i32
  }
  func.func @transform_3(%arg0: i32, %arg1: i32) -> (i32, i32, i32) {
    %c0_i32 = arith.constant 0 : i32
    %c0_i32_0 = arith.constant 0 : i32
    %c0_i32_1 = arith.constant 0 : i32
    return %arg0, %c0_i32, %c0_i32_0 : i32, i32, i32
  }
}

</mosaic_0001>

<llo_original>
// kernel: tpu_custom_call.1
$region0: #{tpu_custom_call.1}
  #allocation0 [shape = 'u32[]', space=smem, size = 0x4, offset = 0x4, fixed_abs, tag = 'smem constant byte address 0x4 - core index']
  #allocation1 [shape = 'u32[144,128]{1,0:T(1,128)}', space=vmem, size = 0x12000, scoped, tag = 'internal scratch']
  %s0 = inlined_call_operand.hbm [shape: f32[2,128], index: 0, kind: input, shape index: {}]
  %s1 = inlined_call_operand.vmem [shape: f32[2,128], index: 1, kind: input, shape index: {}]
  %s2 = inlined_call_operand.vmem [shape: f32[2,128], index: 2, kind: input, shape index: {}]
  %s3 = inlined_call_operand.hbm [shape: f32[1,1,1], index: 3, kind: output, shape index: {}]
  %s4 = sld [smem:[#allocation0]]
  $region30: #{tpu_custom_call.1} parent=0
    _
  %s6 = ssub.s32 1, %s4
  %s7 = scalar_select 0, %s6, %s4
  $region1: #{tpu_custom_call.1} parent=0
    #allocation2 [shape = 'u8[1024]{0}', space=vmem, size = 0x400, scoped, tag = 'input window, operand 0, single buffered']
    #allocation3 [shape = 's32[1]{0}', space=sflag, size = 0x4, scoped, tag = 'scoped memory for tpu_custom_call.1']
    #allocation4 [shape = 's32[1]{0}', space=sflag, size = 0x4, scoped, tag = 'scoped memory for tpu_custom_call.1']
    #allocation5 [shape = 'u8[512]{0}', space=vmem, size = 0x400, scoped, tag = 'output window, operand 0, single buffered']
    %8 = vsyncpa [#allocation3], 0
    %9 = vsyncpa [#allocation4], 0
    // Predicated region
    $region2: #{tpu_custom_call.1} parent=1 // pred_check
      _
    $region3: #{tpu_custom_call.1} parent=1 // pred_check_branch
      %11 = sbr.rel (0) target = $region5
    $region4: #{tpu_custom_call.1} parent=1 // pred_region
      %s12 = sadd.s32 0, 0
      %p13 = scmp.lt.s32.totalorder %s12, 0
      %s14 = scalar_select %p13, %s12, 0
      %s16 = ssub.s32 32, 32
      %17 = vsyncadd [#allocation3], %s16
      %s18 = smul.addr %s14, 32
      %s19 = scalar_lea.hbm %s0, %s18
      %s21 = sshll.u32 [#allocation2], 4
      %s22 = int_to_ptr.vmem [resolvable:$true] %s21
      %24 = dma.hbm_to_vmem [thread:$0]  %s19, 32, %s22, [#allocation3]
    $region5: #{tpu_custom_call.1} parent=1 // pred_fallthru
      _
    // Predicated region
    $region6: #{tpu_custom_call.1} parent=1 // pred_check
      _
    $region7: #{tpu_custom_call.1} parent=1 // pred_check_branch
      %26 = sbr.rel (0) target = $region9
    $region8: #{tpu_custom_call.1} parent=1 // pred_region
      %s27 = sadd.s32 0, 0
      %p28 = scmp.lt.s32.totalorder %s27, 0
      %s29 = scalar_select %p28, %s27, 0
      %p30 = scmp.lt.s32.totalorder %s29, 0
      %s31 = scalar_select %p30, %s29, 0
      %s32 = smul.addr %s31, 2
      %s33 = scalar_lea.vmem %s1, %s32
      %s34 = sadd.s32 0, 0
      %p35 = scmp.lt.s32.totalorder %s34, 0
      %s36 = scalar_select %p35, %s34, 0
    $region9: #{tpu_custom_call.1} parent=1 // pred_fallthru
      _
    // Predicated region
    $region10: #{tpu_custom_call.1} parent=1 // pred_check
      _
    $region11: #{tpu_custom_call.1} parent=1 // pred_check_branch
      %38 = sbr.rel (0) target = $region13
    $region12: #{tpu_custom_call.1} parent=1 // pred_region
      %s39 = sadd.s32 0, 0
      %p40 = scmp.lt.s32.totalorder %s39, 0
      %s41 = scalar_select %p40, %s39, 0
      %p42 = scmp.lt.s32.totalorder %s41, 0
      %s43 = scalar_select %p42, %s41, 0
      %s44 = smul.addr %s43, 2
      %s45 = scalar_lea.vmem %s2, %s44
      %s46 = sadd.s32 0, 0
      %p47 = scmp.lt.s32.totalorder %s46, 0
      %s48 = scalar_select %p47, %s46, 0
    $region13: #{tpu_custom_call.1} parent=1 // pred_fallthru
      _
    // Predicated region
    $region14: #{tpu_custom_call.1} parent=1 // pred_check
      _
    $region15: #{tpu_custom_call.1} parent=1 // pred_check_branch
      %50 = sbr.rel (0) target = $region17
    $region16: #{tpu_custom_call.1} parent=1 // pred_region
      %51 = dma.done [#allocation3], 32
    $region17: #{tpu_custom_call.1} parent=1 // pred_fallthru
      _
    %s52 = sadd.s32 0, 0
    %p53 = scmp.lt.s32.totalorder %s52, 0
    %s54 = scalar_select %p53, %s52, 0
    %p55 = scmp.lt.s32.totalorder %s54, 0
    %s56 = scalar_select %p55, %s54, 0
    %s57 = smul.addr %s56, 2
    %s58 = scalar_lea.vmem %s1, %s57
    %s59 = sadd.s32 0, 0
    %p60 = scmp.lt.s32.totalorder %s59, 0
    %s61 = scalar_select %p60, %s59, 0
    %p62 = scmp.lt.s32.totalorder %s61, 0
    %s63 = scalar_select %p62, %s61, 0
    %s64 = smul.addr %s63, 2
    %s65 = scalar_lea.vmem %s2, %s64
    %s66 = sadd.s32 0, 0
    %p67 = scmp.lt.s32.totalorder %s66, 0
    %s68 = scalar_select %p67, %s66, 0
    %s69 = sadd.s32 0, 0
    %p70 = scmp.lt.s32.totalorder %s69, 0
    %s71 = scalar_select %p70, %s69, 0
    %p72 = scmp.lt.s32.totalorder %s71, 0
    %s73 = scalar_select %p72, %s71, 0
    %s74 = smul.addr %s73, 2
    %s75 = scalar_lea.vmem %s1, %s74
    %s76 = sadd.s32 0, 0
    %p77 = scmp.lt.s32.totalorder %s76, 0
    %s78 = scalar_select %p77, %s76, 0
    %s79 = sadd.s32 0, 0
    %p80 = scmp.lt.s32.totalorder %s79, 0
    %s81 = scalar_select %p80, %s79, 0
    %p82 = scmp.lt.s32.totalorder %s81, 0
    %s83 = scalar_select %p82, %s81, 0
    %s84 = smul.addr %s83, 2
    %s85 = scalar_lea.vmem %s2, %s84
    %s86 = sadd.s32 0, 0
    %p87 = scmp.lt.s32.totalorder %s86, 0
    %s88 = scalar_select %p87, %s86, 0
    %p89 = scmp.eq.s32.totalorder 0, 0
    // Predicated region
    $region18: #{tpu_custom_call.1} parent=1 // pred_check
      %p90 = pneg %p89
    $region19: #{tpu_custom_call.1} parent=1 // pred_check_branch
      %92 = sbr.rel (%p90) target = $region21
    $region20: #{tpu_custom_call.1} parent=1 // pred_region
      %vm93 = vcmask 0
      %94 = vst.msk [vmem:[#allocation5] sm:$0x1] %vm93, 0.0
    $region21: #{tpu_custom_call.1} parent=1 // pred_fallthru
      _
    %v95 = vld [vmem:[#allocation2] sm:$0x3]
    %v96 = vld [vmem:[%s75] sm:$0x3]
    %v97 = vld [vmem:[%s85] sm:$0x3]
    %v98 = vsub.f32 %v95, %v96
    %v99 = vadd.f32 %v98, 1e-06
    %v100 = vsub.f32 %v95, %v97
    %v101 = vadd.f32 %v100, 1e-06
    %v102 = vmul.f32 %v99, %v99
    %v103 = vmul.f32 %v101, %v101
    %v104 = vlaneseq
    %v105 = vand.u32 %v104, 127
    %vm106 = vcmp.ge.s32.totalorder %v105, 0
    %vm107 = vcmp.lt.s32.totalorder %v105, 32
    %vm108 = vmand %vm106, %vm107
    %v109 = vsel %vm108, 1, 0
    %vm110 = vcmp.eq.s32.totalorder %v109, 1
    %v111 = vsel %vm110, %v102, 0.0
    %vm112 = vcmask 1041408
    %v113 = vsel %vm112, %v111, 0.0
    %114 = vadd.xlane.f32.xlu0 %v113
    %v115 = vpop.xlane.xlu0 %114
    %v116 = vsel %vm110, %v103, 0.0
    %v117 = vsel %vm112, %v116, 0.0
    %118 = vadd.xlane.f32.xlu0 %v117
    %v119 = vpop.xlane.xlu0 %118
    %v120 = vrsqrt.pop %v115
    %v121 = vmul.f32 %v115, %v120
    %vm122 = vcmp.eq.f32.partialorder %v115, inf
    %v123 = vsel %vm122, %v115, %v121
    %vm124 = vcmp.eq.f32.partialorder %v115, 0.0
    %v125 = vand.u32 %v115, 2147483648
    %v126 = vsel %vm124, %v125, %v123
    %v127 = vrsqrt.pop %v119
    %v128 = vmul.f32 %v119, %v127
    %vm129 = vcmp.eq.f32.partialorder %v119, inf
    %v130 = vsel %vm129, %v119, %v128
    %vm131 = vcmp.eq.f32.partialorder %v119, 0.0
    %v132 = vand.u32 %v119, 2147483648
    %v133 = vsel %vm131, %v132, %v130
    %v134 = vsub.f32 %v126, %v133
    %v135 = vadd.f32 %v134, 1.0
    %v136 = vmax.f32 %v135, 0.0
    %vm137 = vcmp.ge.s32.totalorder %v105, 32
    %vm138 = vcmp.lt.s32.totalorder %v105, 64
    %vm139 = vmand %vm137, %vm138
    %v140 = vsel %vm139, 1, 0
    %vm141 = vcmp.eq.s32.totalorder %v140, 1
    %v142 = vsel %vm141, %v102, 0.0
    %v143 = vsel %vm112, %v142, 0.0
    %144 = vadd.xlane.f32.xlu0 %v143
    %v145 = vpop.xlane.xlu0 %144
    %v146 = vsel %vm141, %v103, 0.0
    %v147 = vsel %vm112, %v146, 0.0
    %148 = vadd.xlane.f32.xlu0 %v147
    %v149 = vpop.xlane.xlu0 %148
    %v150 = vrsqrt.pop %v145
    %v151 = vmul.f32 %v145, %v150
    %vm152 = vcmp.eq.f32.partialorder %v145, inf
    %v153 = vsel %vm152, %v145, %v151
    %vm154 = vcmp.eq.f32.partialorder %v145, 0.0
    %v155 = vand.u32 %v145, 2147483648
    %v156 = vsel %vm154, %v155, %v153
    %v157 = vrsqrt.pop %v149
    %v158 = vmul.f32 %v149, %v157
    %vm159 = vcmp.eq.f32.partialorder %v149, inf
    %v160 = vsel %vm159, %v149, %v158
    %vm161 = vcmp.eq.f32.partialorder %v149, 0.0
    %v162 = vand.u32 %v149, 2147483648
    %v163 = vsel %vm161, %v162, %v160
    %v164 = vsub.f32 %v156, %v163
    %v165 = vadd.f32 %v164, 1.0
    %v166 = vmax.f32 %v165, 0.0
    %v167 = vadd.f32 %v136, %v166
    %vm168 = vcmp.ge.s32.totalorder %v105, 64
    %vm169 = vcmp.lt.s32.totalorder %v105, 96
    %vm170 = vmand %vm168, %vm169
    %v171 = vsel %vm170, 1, 0
    %vm172 = vcmp.eq.s32.totalorder %v171, 1
    %v173 = vsel %vm172, %v102, 0.0
    %v174 = vsel %vm112, %v173, 0.0
    %175 = vadd.xlane.f32.xlu0 %v174
    %v176 = vpop.xlane.xlu0 %175
    %v177 = vsel %vm172, %v103, 0.0
    %v178 = vsel %vm112, %v177, 0.0
    %179 = vadd.xlane.f32.xlu0 %v178
    %v180 = vpop.xlane.xlu0 %179
    %v181 = vrsqrt.pop %v176
    %v182 = vmul.f32 %v176, %v181
    %vm183 = vcmp.eq.f32.partialorder %v176, inf
    %v184 = vsel %vm183, %v176, %v182
    %vm185 = vcmp.eq.f32.partialorder %v176, 0.0
    %v186 = vand.u32 %v176, 2147483648
    %v187 = vsel %vm185, %v186, %v184
    %v188 = vrsqrt.pop %v180
    %v189 = vmul.f32 %v180, %v188
    %vm190 = vcmp.eq.f32.partialorder %v180, inf
    %v191 = vsel %vm190, %v180, %v189
    %vm192 = vcmp.eq.f32.partialorder %v180, 0.0
    %v193 = vand.u32 %v180, 2147483648
    %v194 = vsel %vm192, %v193, %v191
    %v195 = vsub.f32 %v187, %v194
    %v196 = vadd.f32 %v195, 1.0
    %v197 = vmax.f32 %v196, 0.0
    %v198 = vadd.f32 %v167, %v197
    %vm199 = vcmp.ge.s32.totalorder %v105, 96
    %vm200 = vcmp.lt.s32.totalorder %v105, 128
    %vm201 = vmand %vm199, %vm200
    %v202 = vsel %vm201, 1, 0
    %vm203 = vcmp.eq.s32.totalorder %v202, 1
    %v204 = vsel %vm203, %v102, 0.0
    %v205 = vsel %vm112, %v204, 0.0
    %206 = vadd.xlane.f32.xlu0 %v205
    %v207 = vpop.xlane.xlu0 %206
    %v208 = vsel %vm203, %v103, 0.0
    %v209 = vsel %vm112, %v208, 0.0
    %210 = vadd.xlane.f32.xlu0 %v209
    %v211 = vpop.xlane.xlu0 %210
    %v212 = vrsqrt.pop %v207
    %v213 = vmul.f32 %v207, %v212
    %vm214 = vcmp.eq.f32.partialorder %v207, inf
    %v215 = vsel %vm214, %v207, %v213
    %vm216 = vcmp.eq.f32.partialorder %v207, 0.0
    %v217 = vand.u32 %v207, 2147483648
    %v218 = vsel %vm216, %v217, %v215
    %v219 = vrsqrt.pop %v211
    %v220 = vmul.f32 %v211, %v219
    %vm221 = vcmp.eq.f32.partialorder %v211, inf
    %v222 = vsel %vm221, %v211, %v220
    %vm223 = vcmp.eq.f32.partialorder %v211, 0.0
    %v224 = vand.u32 %v211, 2147483648
    %v225 = vsel %vm223, %v224, %v222
    %v226 = vsub.f32 %v218, %v225
    %v227 = vadd.f32 %v226, 1.0
    %v228 = vmax.f32 %v227, 0.0
    %v229 = vadd.f32 %v198, %v228
    %v230 = vld [vmem:[#allocation5] sm:$0x1]
    %v231 = vsel %vm112, %v229, 0.0
    %v232 = vrot.slane %v231, 4
    %v233 = vadd.f32 %v231, %v232
    %v234 = vrot.slane %v233, 2
    %v235 = vadd.f32 %v233, %v234
    %v236 = vrot.slane %v235, 1
    %v237 = vadd.f32 %v235, %v236
    %v238 = vadd.f32 %v230, %v237
    %vm239 = vcmask 0
    %240 = vst.msk [vmem:[#allocation5] sm:$0x1] %vm239, %v238
    // Predicated region
    $region22: #{tpu_custom_call.1} parent=1 // pred_check
      _
    $region23: #{tpu_custom_call.1} parent=1 // pred_check_branch
      %242 = sbr.rel (0) target = $region25
    $region24: #{tpu_custom_call.1} parent=1 // pred_region
      %s244 = ssub.s32 16, 16
      %245 = vsyncadd [#allocation4], %s244
      %s247 = sshll.u32 [#allocation5], 4
      %s248 = int_to_ptr.vmem [resolvable:$true] %s247
      %250 = dma.vmem_to_hbm [thread:$0]  %s248, 16, %s3, [#allocation4]
    $region25: #{tpu_custom_call.1} parent=1 // pred_fallthru
      _
    // Predicated region
    $region26: #{tpu_custom_call.1} parent=1 // pred_check
      _
    $region27: #{tpu_custom_call.1} parent=1 // pred_check_branch
      %252 = sbr.rel (0) target = $region29
    $region28: #{tpu_custom_call.1} parent=1 // pred_region
      %253 = dma.done [#allocation4], 16
    $region29: #{tpu_custom_call.1} parent=1 // pred_fallthru
      _
    %254 = vsyncpa [#allocation3], 1
    %255 = vsyncpa [#allocation4], 1

</llo_original>
